<compile_context>
chip_gen: v7x
topology: tpu7x:2x2x1
jax: 0.10.0
libtpu: 0.0.40
codegen_flags: <defaults>
</compile_context>

<pallas_src>
import jax
import jax.numpy as jnp
from jax import lax
from jax.experimental import pallas as pl
from jax.experimental.pallas import tpu as pltpu

_BN_EPS = 1e-5


def _pick_hw_tile(hw):
    # Largest lane-aligned tile that divides HW; fall back to full extent
    # (full-extent blocks are exempt from the (8,128) divisibility rule).
    for t in (2048, 1024, 512, 256, 128):
        if hw % t == 0:
            return t
    return hw


def _stats_kernel(x_ref, s_ref, g_ref):
    # x_ref: (C_in, T) slab of ReLU-conv input (channels on sublanes, spatial on lanes).
    # s_ref: (C_in, 1) per-channel sums; g_ref: (C_in, C_in) Gram.  Both resident
    # across the whole grid (constant index_map) -> accumulator pattern.
    @pl.when(jnp.logical_and(pl.program_id(0) == 0, pl.program_id(1) == 0))
    def _():
        s_ref[...] = jnp.zeros_like(s_ref)
        g_ref[...] = jnp.zeros_like(g_ref)

    p = jnp.maximum(x_ref[...].astype(jnp.float32), 0.0)          # ReLU (VPU)
    s_ref[...] += jnp.sum(p, axis=1, keepdims=True)                # lane reduce (XLU)
    # G += p @ p^T without materializing a transpose.
    g_ref[...] += lax.dot_general(p, p, (((1,), (1,)), ((), ())),
                                  preferred_element_type=jnp.float32)


def _conv_bn_kernel(x_ref, ws_ref, b_ref, o_ref):
    # x_ref: (C_in, T); ws_ref: (C_out, C_in) BN-folded weights; b_ref: (C_out, 1).
    # o_ref: (C_out, T) -- lane-dense output block.
    p = jnp.maximum(x_ref[...].astype(jnp.float32), 0.0)           # ReLU
    y = jnp.dot(ws_ref[...], p, preferred_element_type=jnp.float32)
    o_ref[...] = (y + b_ref[...]).astype(o_ref.dtype)


def std_conv(x, wt):
    """ReLU -> 1x1 conv (stride 1, no bias) -> BatchNorm2d(affine=False), train mode.

    x: (N, C_in, H, W) NCHW.  wt: (C_out, C_in) (PyTorch conv weight squeezed).
    Returns (N, C_out, H, W) NCHW.
    """
    N, C_in, H, W = x.shape
    C_out = wt.shape[0]
    HW = H * W
    M = N * HW
    T = _pick_hw_tile(HW)
    grid = (N, HW // T)

    x3 = x.reshape(N, C_in, HW)  # free: merge of trailing contiguous dims, stays NCHW

    # ---- pass 1: BN statistics inputs (per-channel sums + Gram of ReLU(x)) ----
    s, g = pl.pallas_call(
        _stats_kernel,
        out_shape=(jax.ShapeDtypeStruct((C_in, 1), jnp.float32),
                   jax.ShapeDtypeStruct((C_in, C_in), jnp.float32)),
        grid=grid,
        in_specs=[pl.BlockSpec((None, C_in, T), lambda n, t: (n, 0, t))],
        out_specs=(pl.BlockSpec((C_in, 1), lambda n, t: (0, 0)),
                   pl.BlockSpec((C_in, C_in), lambda n, t: (0, 0))),
        compiler_params=pltpu.CompilerParams(
            dimension_semantics=("arbitrary", "arbitrary")),
    )(x3)

    # ---- fold BN into the conv weights (tiny (C_out x C_in) math, stays in XLA) ----
    wt_f32 = wt.astype(jnp.float32)
    mean = (wt_f32 @ s) / M                                         # (C_out, 1)
    ey2 = jnp.sum((wt_f32 @ g) * wt_f32, axis=1, keepdims=True) / M # diag(W^T G W)/M
    var = ey2 - jnp.square(mean)                                    # biased variance
    inv_std = lax.rsqrt(var + _BN_EPS)
    w_scaled = wt_f32 * inv_std                                     # (C_out, C_in)
    bias = -mean * inv_std                                          # (C_out, 1)

    # ---- pass 2: M-parallel fused ReLU + 1x1 conv + BN, lane-dense output ----
    out = pl.pallas_call(
        _conv_bn_kernel,
        out_shape=jax.ShapeDtypeStruct((N, C_out, HW), x.dtype),
        grid=grid,
        in_specs=[pl.BlockSpec((None, C_in, T), lambda n, t: (n, 0, t)),
                  pl.BlockSpec((C_out, C_in), lambda n, t: (0, 0)),
                  pl.BlockSpec((C_out, 1), lambda n, t: (0, 0))],
        out_specs=pl.BlockSpec((None, C_out, T), lambda n, t: (n, 0, t)),
        compiler_params=pltpu.CompilerParams(
            dimension_semantics=("parallel", "parallel")),
    )(x3, w_scaled, bias)

    return out.reshape(N, C_out, H, W)


def make_calibration_params(key, in_channels, out_channels, dtype=jnp.float32):
    if in_channels == out_channels:
        return None  # Calibration is the identity
    # PyTorch Conv2d default init: kaiming_uniform(a=sqrt(5)) -> U(-1/sqrt(fan_in), +)
    bound = 1.0 / (in_channels ** 0.5)
    w = jax.random.uniform(key, (out_channels, in_channels), dtype, -bound, bound)
    return {"w": w}


def calibration(params, x):
    if params is None:           # in_channels == out_channels
        return x
    return std_conv(x, params["w"])


def _reference(params, x):
    if params is None:
        return x
    wt = params["w"].astype(jnp.float32)
    p = jnp.maximum(x.astype(jnp.float32), 0.0)
    y = jnp.einsum('oi,nihw->nohw', wt, p)
    mean = jnp.mean(y, axis=(0, 2, 3), keepdims=True)
    var = jnp.mean(jnp.square(y - mean), axis=(0, 2, 3), keepdims=True)
    return ((y - mean) * lax.rsqrt(var + _BN_EPS)).astype(x.dtype)


if __name__ == "__main__":
    key = jax.random.PRNGKey(0)
    k_w, k_x = jax.random.split(key)

    in_channels, out_channels = 4, 8
    x = jax.random.normal(k_x, (2, in_channels, 16, 16), jnp.float32)

    # non-identity path: ReLU -> 1x1 conv -> BN, via the Pallas kernels
    params = make_calibration_params(k_w, in_channels, out_channels)
    out = jax.jit(calibration)(params, x)
    jax.block_until_ready(out)
    assert out.shape == (2, out_channels, 16, 16), out.shape
    ref = _reference(params, x)
    assert jnp.allclose(out, ref, atol=1e-3, rtol=1e-3), float(
        jnp.max(jnp.abs(out - ref)))

    # identity path (in_channels == out_channels): Calibration.forward returns x
    id_params = make_calibration_params(k_w, in_channels, in_channels)
    out_id = calibration(id_params, x)
    jax.block_until_ready(out_id)
    assert out_id.shape == x.shape

    print("KERNEL_OK")
</pallas_src>

<mosaic_0001>
module attributes {stable_mosaic.version = 11 : i64} {
  func.func @_stats_kernel(%arg0: i32, %arg1: i32, %arg2: memref<1x4x256xf32, #tpu.memory_space<vmem>>, %arg3: memref<4x1xf32, #tpu.memory_space<vmem>>, %arg4: memref<4x4xf32, #tpu.memory_space<vmem>>) attributes {dimension_semantics = [#tpu.dimension_semantics<arbitrary>, #tpu.dimension_semantics<arbitrary>], iteration_bounds = array<i64: 2, 1>, scalar_prefetch = 0 : i64, scratch_operands = 0 : i64, tpu.core_type = #tpu.core_type<tc>, window_params = [{transform_indices = @transform_0, window_bounds = array<i64: 1, 4, 256>}, {pipeline_mode = #tpu.pipeline_mode<synchronous>, transform_indices = @transform_1, window_bounds = array<i64: 4, 1>}, {pipeline_mode = #tpu.pipeline_mode<synchronous>, transform_indices = @transform_2, window_bounds = array<i64: 4, 4>}]} {
    %c0_i32 = arith.constant 0 : i32
    %0 = arith.cmpi eq, %arg0, %c0_i32 : i32
    %c0_i32_0 = arith.constant 0 : i32
    %1 = arith.cmpi eq, %arg1, %c0_i32_0 : i32
    %2 = arith.andi %0, %1 : i1
    %3 = arith.extui %2 : i1 to i32
    %c0_i32_1 = arith.constant 0 : i32
    %4 = arith.cmpi ne, %3, %c0_i32_1 : i32
    scf.if %4 {
      %cst_14 = arith.constant 0.000000e+00 : f32
      %18 = vector.broadcast %cst_14 : f32 to vector<4x1xf32>
      %c0_15 = arith.constant 0 : index
      %c0_16 = arith.constant 0 : index
      %19 = vector.load %arg3[%c0_15, %c0_16] : memref<4x1xf32, #tpu.memory_space<vmem>>, vector<4x1xf32>
      tpu.vector_store %arg3[%c0_15, %c0_16], %18 {strides = array<i32>} : memref<4x1xf32, #tpu.memory_space<vmem>>, vector<4x1xf32>,
      %cst_17 = arith.constant 0.000000e+00 : f32
      %20 = vector.broadcast %cst_17 : f32 to vector<4x4xf32>
      %c0_18 = arith.constant 0 : index
      %c0_19 = arith.constant 0 : index
      %21 = vector.load %arg4[%c0_18, %c0_19] : memref<4x4xf32, #tpu.memory_space<vmem>>, vector<4x4xf32>
      tpu.vector_store %arg4[%c0_18, %c0_19], %20 {strides = array<i32>} : memref<4x4xf32, #tpu.memory_space<vmem>>, vector<4x4xf32>,
    } else {
    }
    %c0 = arith.constant 0 : index
    %c0_2 = arith.constant 0 : index
    %c0_3 = arith.constant 0 : index
    %5 = vector.load %arg2[%c0, %c0_2, %c0_3] : memref<1x4x256xf32, #tpu.memory_space<vmem>>, vector<1x4x256xf32>
    %6 = vector.shape_cast %5 : vector<1x4x256xf32> to vector<4x256xf32>
    %cst = arith.constant 0.000000e+00 : f32
    %7 = vector.broadcast %cst : f32 to vector<4x256xf32>
    %8 = arith.maximumf %6, %7 : vector<4x256xf32>
    %c0_4 = arith.constant 0 : index
    %c0_5 = arith.constant 0 : index
    %9 = vector.load %arg3[%c0_4, %c0_5] : memref<4x1xf32, #tpu.memory_space<vmem>>, vector<4x1xf32>
    %cst_6 = arith.constant dense<0.000000e+00> : vector<4xf32>
    %10 = vector.multi_reduction <add>, %8, %cst_6 [1] : vector<4x256xf32> to vector<4xf32>
    %11 = vector.shape_cast %10 : vector<4xf32> to vector<4x1xf32>
    %12 = arith.addf %9, %11 : vector<4x1xf32>
    %c0_7 = arith.constant 0 : index
    %c0_8 = arith.constant 0 : index
    %13 = vector.load %arg3[%c0_7, %c0_8] : memref<4x1xf32, #tpu.memory_space<vmem>>, vector<4x1xf32>
    tpu.vector_store %arg3[%c0_7, %c0_8], %12 {strides = array<i32>} : memref<4x1xf32, #tpu.memory_space<vmem>>, vector<4x1xf32>,
    %c0_9 = arith.constant 0 : index
    %c0_10 = arith.constant 0 : index
    %14 = vector.load %arg4[%c0_9, %c0_10] : memref<4x4xf32, #tpu.memory_space<vmem>>, vector<4x4xf32>
    %cst_11 = arith.constant dense<0.000000e+00> : vector<4x4xf32>
    %15 = tpu.matmul %8, %8, %cst_11 {dimension_numbers = #tpu.dot_dimension_numbers<[1], [1], [0], [0], [0, 0, 1, 0], [], []>} : vector<4x256xf32>, vector<4x256xf32>, vector<4x4xf32> -> vector<4x4xf32>
    %16 = arith.addf %14, %15 : vector<4x4xf32>
    %c0_12 = arith.constant 0 : index
    %c0_13 = arith.constant 0 : index
    %17 = vector.load %arg4[%c0_12, %c0_13] : memref<4x4xf32, #tpu.memory_space<vmem>>, vector<4x4xf32>
    tpu.vector_store %arg4[%c0_12, %c0_13], %16 {strides = array<i32>} : memref<4x4xf32, #tpu.memory_space<vmem>>, vector<4x4xf32>,
    return
  }
  func.func @transform_0(%arg0: i32, %arg1: i32) -> (i32, i32, i32) {
    %c0_i32 = arith.constant 0 : i32
    %c0_i32_0 = arith.constant 0 : i32
    return %arg0, %c0_i32, %arg1 : i32, i32, i32
  }
  func.func @transform_1(%arg0: i32, %arg1: i32) -> (i32, i32) {
    %c0_i32 = arith.constant 0 : i32
    %c0_i32_0 = arith.constant 0 : i32
    %c0_i32_1 = arith.constant 0 : i32
    return %c0_i32, %c0_i32_0 : i32, i32
  }
  func.func @transform_2(%arg0: i32, %arg1: i32) -> (i32, i32) {
    %c0_i32 = arith.constant 0 : i32
    %c0_i32_0 = arith.constant 0 : i32
    %c0_i32_1 = arith.constant 0 : i32
    return %c0_i32, %c0_i32_0 : i32, i32
  }
}

module attributes {stable_mosaic.version = 11 : i64} {
  func.func @_conv_bn_kernel(%arg0: i32, %arg1: i32, %arg2: memref<1x4x256xf32, #tpu.memory_space<vmem>>, %arg3: memref<8x4xf32, #tpu.memory_space<vmem>>, %arg4: memref<8x1xf32, #tpu.memory_space<vmem>>, %arg5: memref<1x8x256xf32, #tpu.memory_space<vmem>>) attributes {dimension_semantics = [#tpu.dimension_semantics<parallel>, #tpu.dimension_semantics<parallel>], iteration_bounds = array<i64: 2, 1>, scalar_prefetch = 0 : i64, scratch_operands = 0 : i64, tpu.core_type = #tpu.core_type<tc>, window_params = [{transform_indices = @transform_0, window_bounds = array<i64: 1, 4, 256>}, {pipeline_mode = #tpu.pipeline_mode<synchronous>, transform_indices = @transform_1, window_bounds = array<i64: 8, 4>}, {pipeline_mode = #tpu.pipeline_mode<synchronous>, transform_indices = @transform_2, window_bounds = array<i64: 8, 1>}, {transform_indices = @transform_3, window_bounds = array<i64: 1, 8, 256>}]} {
    %c0 = arith.constant 0 : index
    %c0_0 = arith.constant 0 : index
    %c0_1 = arith.constant 0 : index
    %0 = vector.load %arg2[%c0, %c0_0, %c0_1] : memref<1x4x256xf32, #tpu.memory_space<vmem>>, vector<1x4x256xf32>
    %1 = vector.shape_cast %0 : vector<1x4x256xf32> to vector<4x256xf32>
    %cst = arith.constant 0.000000e+00 : f32
    %2 = vector.broadcast %cst : f32 to vector<4x256xf32>
    %3 = arith.maximumf %1, %2 : vector<4x256xf32>
    %c0_2 = arith.constant 0 : index
    %c0_3 = arith.constant 0 : index
    %4 = vector.load %arg3[%c0_2, %c0_3] : memref<8x4xf32, #tpu.memory_space<vmem>>, vector<8x4xf32>
    %cst_4 = arith.constant dense<0.000000e+00> : vector<8x256xf32>
    %5 = tpu.matmul %4, %3, %cst_4 {dimension_numbers = #tpu.dot_dimension_numbers<[1], [0], [0], [1], [0, 0, 1, 1], [], []>} : vector<8x4xf32>, vector<4x256xf32>, vector<8x256xf32> -> vector<8x256xf32>
    %c0_5 = arith.constant 0 : index
    %c0_6 = arith.constant 0 : index
    %6 = vector.load %arg4[%c0_5, %c0_6] : memref<8x1xf32, #tpu.memory_space<vmem>>, vector<8x1xf32>
    %7 = vector.broadcast %6 : vector<8x1xf32> to vector<8x256xf32>
    %8 = arith.addf %5, %7 : vector<8x256xf32>
    %c0_7 = arith.constant 0 : index
    %c0_8 = arith.constant 0 : index
    %c0_9 = arith.constant 0 : index
    %9 = vector.load %arg5[%c0_7, %c0_8, %c0_9] : memref<1x8x256xf32, #tpu.memory_space<vmem>>, vector<1x8x256xf32>
    %10 = vector.shape_cast %9 : vector<1x8x256xf32> to vector<8x256xf32>
    %11 = vector.shape_cast %8 : vector<8x256xf32> to vector<1x8x256xf32>
    tpu.vector_store %arg5[%c0_7, %c0_8, %c0_9], %11 {strides = array<i32>} : memref<1x8x256xf32, #tpu.memory_space<vmem>>, vector<1x8x256xf32>,
    return
  }
  func.func @transform_0(%arg0: i32, %arg1: i32) -> (i32, i32, i32) {
    %c0_i32 = arith.constant 0 : i32
    %c0_i32_0 = arith.constant 0 : i32
    return %arg0, %c0_i32, %arg1 : i32, i32, i32
  }
  func.func @transform_1(%arg0: i32, %arg1: i32) -> (i32, i32) {
    %c0_i32 = arith.constant 0 : i32
    %c0_i32_0 = arith.constant 0 : i32
    %c0_i32_1 = arith.constant 0 : i32
    return %c0_i32, %c0_i32_0 : i32, i32
  }
  func.func @transform_2(%arg0: i32, %arg1: i32) -> (i32, i32) {
    %c0_i32 = arith.constant 0 : i32
    %c0_i32_0 = arith.constant 0 : i32
    %c0_i32_1 = arith.constant 0 : i32
    return %c0_i32, %c0_i32_0 : i32, i32
  }
  func.func @transform_3(%arg0: i32, %arg1: i32) -> (i32, i32, i32) {
    %c0_i32 = arith.constant 0 : i32
    %c0_i32_0 = arith.constant 0 : i32
    return %arg0, %c0_i32, %arg1 : i32, i32, i32
  }
}

</mosaic_0001>

<llo_original>
// kernel: calibration.3
$region0: #{calibration.3}
  #allocation0 [shape = 'u32[]', space=smem, size = 0x4, offset = 0x4, fixed_abs, tag = 'smem constant byte address 0x4 - core index']
  #allocation1 [shape = 'u32[144,128]{1,0:T(1,128)}', space=vmem, size = 0x12000, scoped, tag = 'internal scratch']
  %s0 = inlined_call_operand.vmem [shape: f32[2,4,256], index: 0, kind: input, shape index: {}]
  %s1 = inlined_call_operand.vmem [shape: f32[8,4], index: 1, kind: input, shape index: {}]
  %s2 = inlined_call_operand.vmem [shape: f32[8,1], index: 2, kind: input, shape index: {}]
  %s3 = inlined_call_operand.vmem [shape: f32[2,8,256], index: 3, kind: output, shape index: {}]
  %s4 = sld [smem:[#allocation0]]
  $region45: #{calibration.3} parent=0
    _
  %s6 = ssub.s32 1, %s4
  %s7 = scalar_select 0, %s6, %s4
  loop: start=0, step=1, limit=4
  $region2: #{calibration.3} parent=0 // loop_pre_header
    _
  $region3: #{calibration.3} parent=0 // loop_header
    %s9 = sphi 0, %s13
    %p10 = scmp.ge.s32.totalorder %s9, 4
    %s16 = sphi 0, %s28
    %s17 = sphi 0, %s24
    %s18 = sphi 0, %s16
    %s19 = sphi 0, %s17
    %s20 = sphi 0, %s18
    %s21 = sphi 0, %s19
    %s33 = sphi 0, %s35
    %s36 = sphi 0, %s33
    %s37 = sphi 0, %s36
    %s53 = sphi 0, %s37
    %s57 = sphi 0, %s57
    %s59 = sphi 0, %s57
    %s60 = sphi 0, %s59
    %s74 = sphi 0, %s60
    %s78 = sphi 0, %s78
    %s80 = sphi 0, %s78
    %s81 = sphi 0, %s80
    %s95 = sphi 0, %s81
    %s103 = sphi 0, %s105
    %s106 = sphi 0, %s103
    %s107 = sphi 0, %s106
    %s123 = sphi 0, %s107
  $region4: #{calibration.3} parent=0 // loop_header_branch
    %12 = sbr.rel (%p10) target = $region8
  $region5: #{calibration.3} parent=0 // loop_body
    %s14 = ssub.s32 %s9, 1
    %s15 = ssub.s32 %s9, 2
    %s22 = sadd.s32 1, %s17
    %p23 = scmp.ge.s32.totalorder %s22, 1
    %s24 = scalar_select %p23, 0, %s22
    %s25 = sadd.s32 1, %s16
    %s26 = scalar_select %p23, %s25, %s16
    %p27 = scmp.ge.s32.totalorder %s26, 2
    %s28 = scalar_select %p27, 0, %s26
    %s29 = ssub.s32 %s16, %s28
    %s30 = ssub.s32 %s17, %s24
    %s31 = sor.u32 %s29, %s30
    %p32 = scmp.eq.s32.totalorder %s31, 0
    %s34 = sadd.s32 %s33, 1
    %s35 = scalar_select %p32, %s33, %s34
    %p38 = pneg %p32
    %p39 = scmp.eq.s32.totalorder %s9, 1
    %p40 = por %p38, %p39
    %p41 = scmp.ne.s32.totalorder %s33, %s36
    %p42 = scmp.eq.s32.totalorder %s9, 0
    %p43 = por %p41, %p42
    %p44 = scmp.ne.s32.totalorder %s33, %s36
    %p45 = scmp.eq.s32.totalorder %s14, 1
    %p46 = por %p44, %p45
    %p47 = scmp.ne.s32.totalorder %s36, %s37
    %p48 = scmp.eq.s32.totalorder %s14, 0
    %p49 = por %p47, %p48
    %p50 = scmp.ne.s32.totalorder %s36, %s37
    %p51 = scmp.eq.s32.totalorder %s15, 1
    %p52 = por %p50, %p51
    %p54 = scmp.ne.s32.totalorder %s37, %s53
    %p55 = scmp.eq.s32.totalorder %s15, 0
    %p56 = por %p54, %p55
    %s58 = sadd.s32 %s57, 1
    %p61 = scmp.eq.s32.totalorder %s9, 1
    %p62 = scmp.ne.s32.totalorder %s57, %s59
    %p63 = scmp.eq.s32.totalorder %s9, 0
    %p64 = por %p62, %p63
    %p65 = scmp.ne.s32.totalorder %s57, %s59
    %p66 = scmp.eq.s32.totalorder %s14, 1
    %p67 = por %p65, %p66
    %p68 = scmp.ne.s32.totalorder %s59, %s60
    %p69 = scmp.eq.s32.totalorder %s14, 0
    %p70 = por %p68, %p69
    %p71 = scmp.ne.s32.totalorder %s59, %s60
    %p72 = scmp.eq.s32.totalorder %s15, 1
    %p73 = por %p71, %p72
    %p75 = scmp.ne.s32.totalorder %s60, %s74
    %p76 = scmp.eq.s32.totalorder %s15, 0
    %p77 = por %p75, %p76
    %s79 = sadd.s32 %s78, 1
    %p82 = scmp.eq.s32.totalorder %s9, 1
    %p83 = scmp.ne.s32.totalorder %s78, %s80
    %p84 = scmp.eq.s32.totalorder %s9, 0
    %p85 = por %p83, %p84
    %p86 = scmp.ne.s32.totalorder %s78, %s80
    %p87 = scmp.eq.s32.totalorder %s14, 1
    %p88 = por %p86, %p87
    %p89 = scmp.ne.s32.totalorder %s80, %s81
    %p90 = scmp.eq.s32.totalorder %s14, 0
    %p91 = por %p89, %p90
    %p92 = scmp.ne.s32.totalorder %s80, %s81
    %p93 = scmp.eq.s32.totalorder %s15, 1
    %p94 = por %p92, %p93
    %p96 = scmp.ne.s32.totalorder %s81, %s95
    %p97 = scmp.eq.s32.totalorder %s15, 0
    %p98 = por %p96, %p97
    %s99 = ssub.s32 %s16, %s28
    %s100 = ssub.s32 %s17, %s24
    %s101 = sor.u32 %s99, %s100
    %p102 = scmp.eq.s32.totalorder %s101, 0
    %s104 = sadd.s32 %s103, 1
    %s105 = scalar_select %p102, %s103, %s104
    %p108 = pneg %p102
    %p109 = scmp.eq.s32.totalorder %s9, 1
    %p110 = por %p108, %p109
    %p111 = scmp.ne.s32.totalorder %s103, %s106
    %p112 = scmp.eq.s32.totalorder %s9, 0
    %p113 = por %p111, %p112
    %p114 = scmp.ne.s32.totalorder %s103, %s106
    %p115 = scmp.eq.s32.totalorder %s14, 1
    %p116 = por %p114, %p115
    %p117 = scmp.ne.s32.totalorder %s106, %s107
    %p118 = scmp.eq.s32.totalorder %s14, 0
    %p119 = por %p117, %p118
    %p120 = scmp.ne.s32.totalorder %s106, %s107
    %p121 = scmp.eq.s32.totalorder %s15, 1
    %p122 = por %p120, %p121
    %p124 = scmp.ne.s32.totalorder %s107, %s123
    %p125 = scmp.eq.s32.totalorder %s15, 0
    %p126 = por %p124, %p125
    %p127 = scmp.le.s32.totalorder 1, %s9
    %p128 = scmp.lt.s32.totalorder %s9, 3
    %p129 = pnand %p127, %p128
    %p130 = pneg %p129
    // Predicated region
    $region9: #{calibration.3} parent=5 // pred_check
      _
    $region10: #{calibration.3} parent=5 // pred_check_branch
      %132 = sbr.rel (%p129) target = $region12
    $region11: #{calibration.3} parent=5 // pred_region
      %s133 = ssub.s32 %s9, 1
      // Predicated region
      $region13: #{calibration.3} parent=11 // pred_check
        %p134 = pneg %p70
      $region14: #{calibration.3} parent=11 // pred_check_branch
        %136 = sbr.rel (%p134) target = $region16
      $region15: #{calibration.3} parent=11 // pred_region
        _
      $region16: #{calibration.3} parent=11 // pred_fallthru
        _
      // Predicated region
      $region17: #{calibration.3} parent=11 // pred_check
        %p137 = pneg %p91
      $region18: #{calibration.3} parent=11 // pred_check_branch
        %139 = sbr.rel (%p137) target = $region20
      $region19: #{calibration.3} parent=11 // pred_region
        _
      $region20: #{calibration.3} parent=11 // pred_fallthru
        _
    $region12: #{calibration.3} parent=5 // pred_fallthru
      _
    %p140 = scmp.lt.s32.totalorder %s9, 2
    // Predicated region
    $region21: #{calibration.3} parent=5 // pred_check
      %p141 = pneg %p140
    $region22: #{calibration.3} parent=5 // pred_check_branch
      %143 = sbr.rel (%p141) target = $region24
    $region23: #{calibration.3} parent=5 // pred_region
      // Predicated region
      $region25: #{calibration.3} parent=23 // pred_check
        %p144 = pneg %p43
      $region26: #{calibration.3} parent=23 // pred_check_branch
        %146 = sbr.rel (%p144) target = $region28
      $region27: #{calibration.3} parent=23 // pred_region
        %s147 = smul.u32 2, %s17
        %p148 = scmp.lt.s32.totalorder %s16, 1
        %s149 = scalar_select %p148, %s16, 1
        %p150 = scmp.lt.s32.totalorder %s147, 1
        %s151 = scalar_select %p150, %s147, 1
        %s152 = smul.addr %s149, 2
        %s153 = sadd.s32 %s151, %s152
        %s154 = smul.addr %s153, 4
        %s155 = scalar_lea.vmem %s0, %s154
        %s156 = smul.u32 2, %s17
      $region28: #{calibration.3} parent=23 // pred_fallthru
        _
    $region24: #{calibration.3} parent=5 // pred_fallthru
      _
    %p157 = scmp.le.s32.totalorder 1, %s9
    %p158 = scmp.lt.s32.totalorder %s9, 3
    %p159 = pnand %p157, %p158
    %p160 = pneg %p159
    // Predicated region
    $region29: #{calibration.3} parent=5 // pred_check
      _
    $region30: #{calibration.3} parent=5 // pred_check_branch
      %162 = sbr.rel (%p159) target = $region32
    $region31: #{calibration.3} parent=5 // pred_region
      %s163 = ssub.s32 %s9, 1
      %s164 = smul.u32 2, %s19
      %p165 = scmp.lt.s32.totalorder %s18, 1
      %s166 = scalar_select %p165, %s18, 1
      %p167 = scmp.lt.s32.totalorder %s164, 1
      %s168 = scalar_select %p167, %s164, 1
      %s169 = smul.addr %s166, 2
      %s170 = sadd.s32 %s168, %s169
      %s171 = smul.addr %s170, 4
      %s172 = scalar_lea.vmem %s0, %s171
      %p173 = pneg %p49
      %p174 = pneg %p46
      %p175 = pneg %p70
      %p176 = pneg %p67
      %p177 = pneg %p91
      %p178 = pneg %p88
      %p179 = pneg %p119
      %p180 = pneg %p116
      %s181 = smul.u32 2, %s19
      %p182 = scmp.lt.s32.totalorder %s18, 1
      %s183 = scalar_select %p182, %s18, 1
      %p184 = scmp.lt.s32.totalorder %s181, 1
      %s185 = scalar_select %p184, %s181, 1
      %s186 = smul.addr %s183, 2
      %s187 = sadd.s32 %s185, %s186
      %s188 = smul.addr %s187, 8
      %s189 = scalar_lea.vmem %s3, %s188
      %s190 = smul.u32 2, %s19
      %p191 = scmp.lt.s32.totalorder %s18, 1
      %s192 = scalar_select %p191, %s18, 1
      %p193 = scmp.lt.s32.totalorder %s190, 1
      %s194 = scalar_select %p193, %s190, 1
      %s195 = smul.addr %s192, 2
      %s196 = sadd.s32 %s194, %s195
      %s197 = smul.addr %s196, 4
      %s198 = scalar_lea.vmem %s0, %s197
      %s199 = smul.u32 2, %s19
      %s200 = smul.u32 2, %s19
      %p201 = scmp.lt.s32.totalorder %s18, 1
      %s202 = scalar_select %p201, %s18, 1
      %p203 = scmp.lt.s32.totalorder %s200, 1
      %s204 = scalar_select %p203, %s200, 1
      %s205 = smul.addr %s202, 2
      %s206 = sadd.s32 %s204, %s205
      %s207 = smul.addr %s206, 8
      %s208 = scalar_lea.vmem %s3, %s207
      %s209 = smul.u32 2, %s19
      %v210 = vld [vmem:[%s198] sm:$0xff]
      %v211 = vmax.f32 %v210, 0.0
      %v212 = vld [vmem:[%s1] sm:$0xff]
      %v213 = vld [vmem:[%s2] sm:$0xff]
      %215 = vset.pattern.permute.xlu0 0
      %216 = vperm.xlu0 %215, %v213
      %v217 = vpop.permute.xlu0 %216
      %v220 = vcombine.high %v211, %v211
      %vm221 = vcmask 31744
      %v223 = vsel %vm221, %v212, 0
      %vm225 = vcmask 1043456
      %v226 = vsel %vm225, %v211, 0
      %v228 = vsel %vm225, %v220, 0
      %230 = vmatprep.subr.mxu0 %v228
      %231 = vmatpush1.msra.mxu0 %v226
      %232 = vmatprep.subr.mxu0 0.0
      %233 = vmatpush1.msra.mxu0 0.0
      %234 = vmatprep.subr.mxu0 0.0
      %235 = vmatpush1.msra.mxu0 0.0
      %236 = vmatprep.subr.mxu0 0.0
      %237 = vmatpush1.msra.mxu0 0.0
      %238 = vmatprep.subr.mxu0 0.0
      %239 = vmatpush1.msra.mxu0 0.0
      %240 = vmatprep.subr.mxu0 0.0
      %241 = vmatpush1.msra.mxu0 0.0
      %242 = vmatprep.subr.mxu0 0.0
      %243 = vmatpush1.msra.mxu0 0.0
      %244 = vmatprep.subr.mxu0 0.0
      %245 = vmatpush1.msra.mxu0 0.0
      %246 = vmatprep.subr.mxu0 0.0
      %247 = vmatpush1.msra.mxu0 0.0
      %248 = vmatprep.subr.mxu0 0.0
      %249 = vmatpush1.msra.mxu0 0.0
      %250 = vmatprep.subr.mxu0 0.0
      %251 = vmatpush1.msra.mxu0 0.0
      %252 = vmatprep.subr.mxu0 0.0
      %253 = vmatpush1.msra.mxu0 0.0
      %254 = vmatprep.subr.mxu0 0.0
      %255 = vmatpush1.msra.mxu0 0.0
      %256 = vmatprep.subr.mxu0 0.0
      %257 = vmatpush1.msra.mxu0 0.0
      %258 = vmatprep.subr.mxu0 0.0
      %259 = vmatpush1.msra.mxu0 0.0
      %260 = vmatprep.subr.mxu0 0.0
      %261 = vmatpush1.msra.mxu0 0.0
      %262 = vmatprep.subr.mxu0 0.0
      %263 = vmatpush1.msra.mxu0 0.0
      %264 = vmatprep.subr.mxu0 0.0
      %265 = vmatpush1.msra.mxu0 0.0
      %266 = vmatprep.subr.mxu0 0.0
      %267 = vmatpush1.msra.mxu0 0.0
      %268 = vmatprep.subr.mxu0 0.0
      %269 = vmatpush1.msra.mxu0 0.0
      %270 = vmatprep.subr.mxu0 0.0
      %271 = vmatpush1.msra.mxu0 0.0
      %272 = vmatprep.subr.mxu0 0.0
      %273 = vmatpush1.msra.mxu0 0.0
      %274 = vmatprep.subr.mxu0 0.0
      %275 = vmatpush1.msra.mxu0 0.0
      %276 = vmatprep.subr.mxu0 0.0
      %277 = vmatpush1.msra.mxu0 0.0
      %278 = vmatprep.subr.mxu0 0.0
      %279 = vmatpush1.msra.mxu0 0.0
      %280 = vmatprep.subr.mxu0 0.0
      %281 = vmatpush1.msra.mxu0 0.0
      %282 = vmatprep.subr.mxu0 0.0
      %283 = vmatpush1.msra.mxu0 0.0
      %284 = vmatprep.subr.mxu0 0.0
      %285 = vmatpush1.msra.mxu0 0.0
      %286 = vmatprep.subr.mxu0 0.0
      %287 = vmatpush1.msra.mxu0 0.0
      %288 = vmatprep.subr.mxu0 0.0
      %289 = vmatpush1.msra.mxu0 0.0
      %290 = vmatprep.subr.mxu0 0.0
      %291 = vmatpush1.msra.mxu0 0.0
      %292 = vmatprep.subr.mxu0 0.0
      %293 = vmatpush1.msra.mxu0 0.0
      %294 = vmatprep.mubr.f32.mxu0 0.0
      %295 = vmatmul.mubr.f32.gmra.mrb[0].mxu0 %v223
      %v296 = vpop.f32.mrb[0].mxu0
      %v297 = vadd.f32 %v217, %v296
      %v298 = vpop.f32.mrb[0].mxu0
      %v299 = vadd.f32 %v217, %v298
      %300 = vdwg.mxu0
      %301 = vst [vmem:[%s208] sm:$0xff] %v297
      %302 = vst [vmem:[%s208 + $0x8] sm:$0xff] %v299
      %s303 = smul.u32 2, %s19
      %p304 = scmp.lt.s32.totalorder %s18, 1
      %s305 = scalar_select %p304, %s18, 1
      %p306 = scmp.lt.s32.totalorder %s303, 1
      %s307 = scalar_select %p306, %s303, 1
      %s308 = smul.addr %s305, 2
      %s309 = sadd.s32 %s307, %s308
      %s310 = smul.addr %s309, 8
      %s311 = scalar_lea.vmem %s3, %s310
      // Predicated region
      $region33: #{calibration.3} parent=31 // pred_check
        %p312 = pneg %p116
      $region34: #{calibration.3} parent=31 // pred_check_branch
        %314 = sbr.rel (%p312) target = $region36
      $region35: #{calibration.3} parent=31 // pred_region
        %s315 = smul.u32 2, %s19
      $region36: #{calibration.3} parent=31 // pred_fallthru
        _
    $region32: #{calibration.3} parent=5 // pred_fallthru
      _
    %p316 = scmp.le.s32.totalorder 2, %s9
    // Predicated region
    $region37: #{calibration.3} parent=5 // pred_check
      %p317 = pneg %p316
    $region38: #{calibration.3} parent=5 // pred_check_branch
      %319 = sbr.rel (%p317) target = $region40
    $region39: #{calibration.3} parent=5 // pred_region
      %s320 = ssub.s32 %s9, 2
      // Predicated region
      $region41: #{calibration.3} parent=39 // pred_check
        %p321 = pneg %p122
      $region42: #{calibration.3} parent=39 // pred_check_branch
        %323 = sbr.rel (%p321) target = $region44
      $region43: #{calibration.3} parent=39 // pred_region
        %s324 = smul.u32 2, %s21
        %p325 = scmp.lt.s32.totalorder %s20, 1
        %s326 = scalar_select %p325, %s20, 1
        %p327 = scmp.lt.s32.totalorder %s324, 1
        %s328 = scalar_select %p327, %s324, 1
        %s329 = smul.addr %s326, 2
        %s330 = sadd.s32 %s328, %s329
        %s331 = smul.addr %s330, 8
        %s332 = scalar_lea.vmem %s3, %s331
      $region44: #{calibration.3} parent=39 // pred_fallthru
        _
    $region40: #{calibration.3} parent=5 // pred_fallthru
      _
  $region6: #{calibration.3} parent=0 // loop_footer
    %s13 = sadd.s32 1, %s9
  $region7: #{calibration.3} parent=0 // loop_footer_branch
    %8 = sbr.rel target = $region3
  $region8: #{calibration.3} parent=0 // loop_exit
    _

// kernel: calibration.2
$region0: #{calibration.2}
  #allocation0 [shape = 'u32[]', space=smem, size = 0x4, offset = 0x4, fixed_abs, tag = 'smem constant byte address 0x4 - core index']
  #allocation1 [shape = 'u32[144,128]{1,0:T(1,128)}', space=vmem, size = 0x12000, scoped, tag = 'internal scratch']
  %s0 = inlined_call_operand.vmem [shape: f32[2,4,256], index: 0, kind: input, shape index: {}]
  %s1 = inlined_call_operand.vmem [shape: f32[4,1], index: 1, kind: output, shape index: {0}]
  %s2 = inlined_call_operand.vmem [shape: f32[4,4], index: 2, kind: output, shape index: {1}]
  %3 = xla_tuple %s1, %s2
  %s4 = sld [smem:[#allocation0]]
  $region49: #{calibration.2} parent=0
    _
  %s6 = ssub.s32 1, %s4
  %s7 = scalar_select 0, %s6, %s4
  loop: start=0, step=1, limit=4
  $region2: #{calibration.2} parent=0 // loop_pre_header
    _
  $region3: #{calibration.2} parent=0 // loop_header
    %s9 = sphi 0, %s13
    %p10 = scmp.ge.s32.totalorder %s9, 4
    %s16 = sphi 0, %s28
    %s17 = sphi 0, %s24
    %s18 = sphi 0, %s16
    %s19 = sphi 0, %s17
    %s20 = sphi 0, %s18
    %s21 = sphi 0, %s19
    %s33 = sphi 0, %s35
    %s36 = sphi 0, %s33
    %s37 = sphi 0, %s36
    %s53 = sphi 0, %s37
    %s57 = sphi 0, %s57
    %s59 = sphi 0, %s57
    %s60 = sphi 0, %s59
    %s74 = sphi 0, %s60
    %s78 = sphi 0, %s78
    %s80 = sphi 0, %s78
    %s81 = sphi 0, %s80
    %s95 = sphi 0, %s81
  $region4: #{calibration.2} parent=0 // loop_header_branch
    %12 = sbr.rel (%p10) target = $region8
  $region5: #{calibration.2} parent=0 // loop_body
    %s14 = ssub.s32 %s9, 1
    %s15 = ssub.s32 %s9, 2
    %s22 = sadd.s32 1, %s17
    %p23 = scmp.ge.s32.totalorder %s22, 1
    %s24 = scalar_select %p23, 0, %s22
    %s25 = sadd.s32 1, %s16
    %s26 = scalar_select %p23, %s25, %s16
    %p27 = scmp.ge.s32.totalorder %s26, 2
    %s28 = scalar_select %p27, 0, %s26
    %s29 = ssub.s32 %s16, %s28
    %s30 = ssub.s32 %s17, %s24
    %s31 = sor.u32 %s29, %s30
    %p32 = scmp.eq.s32.totalorder %s31, 0
    %s34 = sadd.s32 %s33, 1
    %s35 = scalar_select %p32, %s33, %s34
    %p38 = pneg %p32
    %p39 = scmp.eq.s32.totalorder %s9, 1
    %p40 = por %p38, %p39
    %p41 = scmp.ne.s32.totalorder %s33, %s36
    %p42 = scmp.eq.s32.totalorder %s9, 0
    %p43 = por %p41, %p42
    %p44 = scmp.ne.s32.totalorder %s33, %s36
    %p45 = scmp.eq.s32.totalorder %s14, 1
    %p46 = por %p44, %p45
    %p47 = scmp.ne.s32.totalorder %s36, %s37
    %p48 = scmp.eq.s32.totalorder %s14, 0
    %p49 = por %p47, %p48
    %p50 = scmp.ne.s32.totalorder %s36, %s37
    %p51 = scmp.eq.s32.totalorder %s15, 1
    %p52 = por %p50, %p51
    %p54 = scmp.ne.s32.totalorder %s37, %s53
    %p55 = scmp.eq.s32.totalorder %s15, 0
    %p56 = por %p54, %p55
    %s58 = sadd.s32 %s57, 1
    %p61 = scmp.eq.s32.totalorder %s9, 1
    %p62 = scmp.ne.s32.totalorder %s57, %s59
    %p63 = scmp.eq.s32.totalorder %s9, 0
    %p64 = por %p62, %p63
    %p65 = scmp.ne.s32.totalorder %s57, %s59
    %p66 = scmp.eq.s32.totalorder %s14, 1
    %p67 = por %p65, %p66
    %p68 = scmp.ne.s32.totalorder %s59, %s60
    %p69 = scmp.eq.s32.totalorder %s14, 0
    %p70 = por %p68, %p69
    %p71 = scmp.ne.s32.totalorder %s59, %s60
    %p72 = scmp.eq.s32.totalorder %s15, 1
    %p73 = por %p71, %p72
    %p75 = scmp.ne.s32.totalorder %s60, %s74
    %p76 = scmp.eq.s32.totalorder %s15, 0
    %p77 = por %p75, %p76
    %s79 = sadd.s32 %s78, 1
    %p82 = scmp.eq.s32.totalorder %s9, 1
    %p83 = scmp.ne.s32.totalorder %s78, %s80
    %p84 = scmp.eq.s32.totalorder %s9, 0
    %p85 = por %p83, %p84
    %p86 = scmp.ne.s32.totalorder %s78, %s80
    %p87 = scmp.eq.s32.totalorder %s14, 1
    %p88 = por %p86, %p87
    %p89 = scmp.ne.s32.totalorder %s80, %s81
    %p90 = scmp.eq.s32.totalorder %s14, 0
    %p91 = por %p89, %p90
    %p92 = scmp.ne.s32.totalorder %s80, %s81
    %p93 = scmp.eq.s32.totalorder %s15, 1
    %p94 = por %p92, %p93
    %p96 = scmp.ne.s32.totalorder %s81, %s95
    %p97 = scmp.eq.s32.totalorder %s15, 0
    %p98 = por %p96, %p97
    %p99 = scmp.le.s32.totalorder 1, %s9
    %p100 = scmp.lt.s32.totalorder %s9, 3
    %p101 = pnand %p99, %p100
    %p102 = pneg %p101
    // Predicated region
    $region9: #{calibration.2} parent=5 // pred_check
      _
    $region10: #{calibration.2} parent=5 // pred_check_branch
      %104 = sbr.rel (%p101) target = $region12
    $region11: #{calibration.2} parent=5 // pred_region
      %s105 = ssub.s32 %s9, 1
    $region12: #{calibration.2} parent=5 // pred_fallthru
      _
    %p106 = scmp.lt.s32.totalorder %s9, 2
    // Predicated region
    $region13: #{calibration.2} parent=5 // pred_check
      %p107 = pneg %p106
    $region14: #{calibration.2} parent=5 // pred_check_branch
      %109 = sbr.rel (%p107) target = $region16
    $region15: #{calibration.2} parent=5 // pred_region
      // Predicated region
      $region17: #{calibration.2} parent=15 // pred_check
        %p110 = pneg %p43
      $region18: #{calibration.2} parent=15 // pred_check_branch
        %112 = sbr.rel (%p110) target = $region20
      $region19: #{calibration.2} parent=15 // pred_region
        %s113 = smul.u32 2, %s17
        %p114 = scmp.lt.s32.totalorder %s16, 1
        %s115 = scalar_select %p114, %s16, 1
        %p116 = scmp.lt.s32.totalorder %s113, 1
        %s117 = scalar_select %p116, %s113, 1
        %s118 = smul.addr %s115, 2
        %s119 = sadd.s32 %s117, %s118
        %s120 = smul.addr %s119, 4
        %s121 = scalar_lea.vmem %s0, %s120
        %s122 = smul.u32 2, %s17
      $region20: #{calibration.2} parent=15 // pred_fallthru
        _
    $region16: #{calibration.2} parent=5 // pred_fallthru
      _
    %p123 = scmp.le.s32.totalorder 1, %s9
    %p124 = scmp.lt.s32.totalorder %s9, 3
    %p125 = pnand %p123, %p124
    %p126 = pneg %p125
    // Predicated region
    $region21: #{calibration.2} parent=5 // pred_check
      _
    $region22: #{calibration.2} parent=5 // pred_check_branch
      %128 = sbr.rel (%p125) target = $region24
    $region23: #{calibration.2} parent=5 // pred_region
      %s129 = ssub.s32 %s9, 1
      %s130 = smul.u32 2, %s19
      %p131 = scmp.lt.s32.totalorder %s18, 1
      %s132 = scalar_select %p131, %s18, 1
      %p133 = scmp.lt.s32.totalorder %s130, 1
      %s134 = scalar_select %p133, %s130, 1
      %s135 = smul.addr %s132, 2
      %s136 = sadd.s32 %s134, %s135
      %s137 = smul.addr %s136, 4
      %s138 = scalar_lea.vmem %s0, %s137
      %p139 = pneg %p49
      %p140 = pneg %p46
      %p141 = pneg %p70
      %p142 = pneg %p67
      %p143 = pneg %p91
      %p144 = pneg %p88
      %s145 = smul.u32 2, %s19
      %p146 = scmp.lt.s32.totalorder %s18, 1
      %s147 = scalar_select %p146, %s18, 1
      %p148 = scmp.lt.s32.totalorder %s145, 1
      %s149 = scalar_select %p148, %s145, 1
      %s150 = smul.addr %s147, 2
      %s151 = sadd.s32 %s149, %s150
      %s152 = smul.addr %s151, 4
      %s153 = scalar_lea.vmem %s0, %s152
      %s154 = smul.u32 2, %s19
      %p155 = scmp.eq.s32.totalorder %s18, 0
      %p156 = scmp.eq.s32.totalorder %s19, 0
      %p157 = pnand %p155, %p156
      %p158 = pneg %p157
      // Predicated region
      $region25: #{calibration.2} parent=23 // pred_check
        _
      $region26: #{calibration.2} parent=23 // pred_check_branch
        %160 = sbr.rel (%p157) target = $region28
      $region27: #{calibration.2} parent=23 // pred_region
        %vm161 = vcmask 3072
        %162 = vst.msk [vmem:[%s1] sm:$0xf] %vm161, 0.0
        %vm163 = vcmask 27648
        %164 = vst.msk [vmem:[%s2] sm:$0xf] %vm163, 0.0
      $region28: #{calibration.2} parent=23 // pred_fallthru
        _
      %v165 = vld [vmem:[%s153] sm:$0xff]
      %v166 = vmax.f32 %v165, 0.0
      %v167 = vld [vmem:[%s1] sm:$0xf]
      %v169 = vcombine.high %v166, %v166
      %vm171 = vcmask 1043456
      %v172 = vsel %vm171, %v166, 0.0
      %v173 = vsel %vm171, %v169, 0.0
      %v174 = vadd.f32 %v172, %v173
      %175 = vadd.xlane.f32.xlu0 %v174
      %v176 = vpop.xlane.xlu0 %175
      %v177 = vadd.f32 %v167, %v176
      %vm178 = vcmask 3072
      %179 = vst.msk [vmem:[%s1] sm:$0xf] %vm178, %v177
      %v180 = vld [vmem:[%s2] sm:$0xf]
      %181 = vmatprep.subr.mxu0 %v169
      %182 = vmatpush1.xpose.msra.mxu0 %v166
      %183 = vmatprep.subr.mxu0 0.0
      %184 = vmatpush1.xpose.msra.mxu0 0.0
      %185 = vmatprep.subr.mxu0 0.0
      %186 = vmatpush1.xpose.msra.mxu0 0.0
      %187 = vmatprep.subr.mxu0 0.0
      %188 = vmatpush1.xpose.msra.mxu0 0.0
      %189 = vmatprep.subr.mxu0 0.0
      %190 = vmatpush1.xpose.msra.mxu0 0.0
      %191 = vmatprep.subr.mxu0 0.0
      %192 = vmatpush1.xpose.msra.mxu0 0.0
      %193 = vmatprep.subr.mxu0 0.0
      %194 = vmatpush1.xpose.msra.mxu0 0.0
      %195 = vmatprep.subr.mxu0 0.0
      %196 = vmatpush1.xpose.msra.mxu0 0.0
      %197 = vmatprep.subr.mxu0 0.0
      %198 = vmatpush1.xpose.msra.mxu0 0.0
      %199 = vmatprep.subr.mxu0 0.0
      %200 = vmatpush1.xpose.msra.mxu0 0.0
      %201 = vmatprep.subr.mxu0 0.0
      %202 = vmatpush1.xpose.msra.mxu0 0.0
      %203 = vmatprep.subr.mxu0 0.0
      %204 = vmatpush1.xpose.msra.mxu0 0.0
      %205 = vmatprep.subr.mxu0 0.0
      %206 = vmatpush1.xpose.msra.mxu0 0.0
      %207 = vmatprep.subr.mxu0 0.0
      %208 = vmatpush1.xpose.msra.mxu0 0.0
      %209 = vmatprep.subr.mxu0 0.0
      %210 = vmatpush1.xpose.msra.mxu0 0.0
      %211 = vmatprep.subr.mxu0 0.0
      %212 = vmatpush1.xpose.msra.mxu0 0.0
      %213 = vmatprep.subr.mxu0 0.0
      %214 = vmatpush1.xpose.msra.mxu0 0.0
      %215 = vmatprep.subr.mxu0 0.0
      %216 = vmatpush1.xpose.msra.mxu0 0.0
      %217 = vmatprep.subr.mxu0 0.0
      %218 = vmatpush1.xpose.msra.mxu0 0.0
      %219 = vmatprep.subr.mxu0 0.0
      %220 = vmatpush1.xpose.msra.mxu0 0.0
      %221 = vmatprep.subr.mxu0 0.0
      %222 = vmatpush1.xpose.msra.mxu0 0.0
      %223 = vmatprep.subr.mxu0 0.0
      %224 = vmatpush1.xpose.msra.mxu0 0.0
      %225 = vmatprep.subr.mxu0 0.0
      %226 = vmatpush1.xpose.msra.mxu0 0.0
      %227 = vmatprep.subr.mxu0 0.0
      %228 = vmatpush1.xpose.msra.mxu0 0.0
      %229 = vmatprep.subr.mxu0 0.0
      %230 = vmatpush1.xpose.msra.mxu0 0.0
      %231 = vmatprep.subr.mxu0 0.0
      %232 = vmatpush1.xpose.msra.mxu0 0.0
      %233 = vmatprep.subr.mxu0 0.0
      %234 = vmatpush1.xpose.msra.mxu0 0.0
      %235 = vmatprep.subr.mxu0 0.0
      %236 = vmatpush1.xpose.msra.mxu0 0.0
      %237 = vmatprep.subr.mxu0 0.0
      %238 = vmatpush1.xpose.msra.mxu0 0.0
      %239 = vmatprep.subr.mxu0 0.0
      %240 = vmatpush1.xpose.msra.mxu0 0.0
      %241 = vmatprep.subr.mxu0 0.0
      %242 = vmatpush1.xpose.msra.mxu0 0.0
      %243 = vmatprep.subr.mxu0 0.0
      %244 = vmatpush1.xpose.msra.mxu0 0.0
      %245 = vmatprep.mubr.f32.mxu0 %v169
      %246 = vmatmul.mubr.f32.gmra.mrb[0].mxu0 %v166
      %v247 = vpop.f32.mrb[0].mxu0
      %v248 = vadd.f32 0.0, %v247
      %v249 = vpop.f32.mrb[0].mxu0
      %250 = vdwg.mxu0
      %v251 = vadd.f32 %v180, %v248
      %vm252 = vcmask 27648
      %253 = vst.msk [vmem:[%s2] sm:$0xf] %vm252, %v251
      // Predicated region
      $region29: #{calibration.2} parent=23 // pred_check
        %p254 = pneg %p67
      $region30: #{calibration.2} parent=23 // pred_check_branch
        %256 = sbr.rel (%p254) target = $region32
      $region31: #{calibration.2} parent=23 // pred_region
        _
      $region32: #{calibration.2} parent=23 // pred_fallthru
        _
      // Predicated region
      $region33: #{calibration.2} parent=23 // pred_check
        %p257 = pneg %p88
      $region34: #{calibration.2} parent=23 // pred_check_branch
        %259 = sbr.rel (%p257) target = $region36
      $region35: #{calibration.2} parent=23 // pred_region
        _
      $region36: #{calibration.2} parent=23 // pred_fallthru
        _
      // Predicated region
      $region37: #{calibration.2} parent=23 // pred_check
        %p260 = pneg %p67
      $region38: #{calibration.2} parent=23 // pred_check_branch
        %262 = sbr.rel (%p260) target = $region40
      $region39: #{calibration.2} parent=23 // pred_region
        _
      $region40: #{calibration.2} parent=23 // pred_fallthru
        _
      // Predicated region
      $region41: #{calibration.2} parent=23 // pred_check
        %p263 = pneg %p88
      $region42: #{calibration.2} parent=23 // pred_check_branch
        %265 = sbr.rel (%p263) target = $region44
      $region43: #{calibration.2} parent=23 // pred_region
        _
      $region44: #{calibration.2} parent=23 // pred_fallthru
        _
    $region24: #{calibration.2} parent=5 // pred_fallthru
      _
    %p266 = scmp.le.s32.totalorder 2, %s9
    // Predicated region
    $region45: #{calibration.2} parent=5 // pred_check
      %p267 = pneg %p266
    $region46: #{calibration.2} parent=5 // pred_check_branch
      %269 = sbr.rel (%p267) target = $region48
    $region47: #{calibration.2} parent=5 // pred_region
      %s270 = ssub.s32 %s9, 2
    $region48: #{calibration.2} parent=5 // pred_fallthru
      _
  $region6: #{calibration.2} parent=0 // loop_footer
    %s13 = sadd.s32 1, %s9
  $region7: #{calibration.2} parent=0 // loop_footer_branch
    %8 = sbr.rel target = $region3
  $region8: #{calibration.2} parent=0 // loop_exit
    _

</llo_original>
